<compile_context>
chip_gen: v7x
topology: tpu7x:2x2x1
jax: 0.10.0
libtpu: 0.0.40
codegen_flags: <defaults>
</compile_context>

<pallas_src>
import numpy as np
import jax
import jax.numpy as jnp
from jax.experimental import pallas as pl
from jax.experimental.pallas import tpu as pltpu


_LANE = 128
_SUBLANE = 8
_TK_CAP = 4096            # K-tile cap (multiple of 128)
_MIB = 1024 * 1024


def _round_up(x, m):
    return ((x + m - 1) // m) * m


def _cdiv(a, b):
    return (a + b - 1) // b


def _tpu_vmem_and_cores():
    """Best-effort query of per-core VMEM capacity and TensorCores per chip."""
    vmem_bytes = 64 * _MIB          # conservative fallback (v7x per-TC size)
    cores = 1
    try:
        info = pltpu.get_tpu_info()
        vmem_bytes = int(getattr(info, "vmem_capacity_bytes", vmem_bytes))
        for attr in ("num_cores", "tensorcores_per_chip", "core_count"):
            v = getattr(info, attr, None)
            if v:
                cores = int(v)
                break
    except Exception:
        pass
    try:
        kind = jax.devices()[0].device_kind.lower()
        if "v7" in kind or "tpu7" in kind:
            cores = max(cores, 2)
    except Exception:
        pass
    return vmem_bytes, cores


_VMEM_PHYS, _NUM_CORES = _tpu_vmem_and_cores()
# Scoped-VMEM limit: ~3/4 of physical, clamped to [32, 96] MiB
# (v7x: 48 MiB against 64 MiB physical; v5e/v6e: 96 MiB against 128 MiB).
_VMEM_LIMIT_BYTES = int(min(max((_VMEM_PHYS * 3) // 4, 32 * _MIB), 96 * _MIB))
# Working-set budget used to size the K tile (leave headroom for the compiler).
_TILE_BUDGET = (_VMEM_LIMIT_BYTES * 3) // 4
# Row-tile cap: 256 on multi-TC chips (keep the parallel M axis splittable),
# 512 on single-TC chips.
_TM_CAP = 256 if _NUM_CORES >= 2 else 512


# ----------------------------- Pallas kernel ------------------------------

def _make_segmean_kernel(k_total, tm, tk, n_pad, compute_dtype, ragged_k):
    """Output-stationary segment-mean kernel over grid (M//tm, cdiv(K, tk))."""

    def kernel(x_ref, map_ref, inv_ref, o_ref):
        k = pl.program_id(1)

        @pl.when(k == 0)
        def _():
            o_ref[...] = jnp.zeros_like(o_ref)

        x = x_ref[...]                                        # (tm, tk)
        if ragged_k:
            # Mask columns past the true K in the (possibly OOB) last tile.
            # Never rely on garbage edge data being killed by zero weights.
            col = jax.lax.broadcasted_iota(jnp.int32, (tm, tk), 1)
            valid = (k * tk + col) < k_total
            x = jnp.where(valid, x, jnp.zeros_like(x))

        # Build the 0/1 one-hot weight tile in-register from the int32 mapping
        # column (no dense mask streamed from HBM).  Values are exact in any
        # dtype; OOB mapping garbage only multiplies masked (zero) x columns.
        seg_ids = map_ref[...]                                # (tk, 1) int32
        cols = jax.lax.broadcasted_iota(jnp.int32, (tk, n_pad), 1)
        onehot = (seg_ids == cols).astype(compute_dtype)      # (tk, n_pad)

        o_ref[...] += jnp.dot(
            x.astype(compute_dtype),
            onehot,
            preferred_element_type=jnp.float32,
        )

        @pl.when(k == pl.num_programs(1) - 1)
        def _():
            # sum -> mean (counts are precomputed on host; padded cols get 0).
            o_ref[...] = o_ref[...] * inv_ref[...]

    return kernel


def _segment_mean(x_flat, mapping_col, inv_count, *, tm, tk, n_pad,
                  compute_dtype):
    """x_flat: (M, K), mapping_col: (K, 1) int32, inv_count: (1, n_pad) f32."""
    M, K = x_flat.shape
    gi = _cdiv(M, tm)
    gk = _cdiv(K, tk)
    ragged_k = (K % tk) != 0

    kernel = _make_segmean_kernel(K, tm, tk, n_pad, compute_dtype, ragged_k)

    cost = pl.CostEstimate(
        flops=2 * M * K * n_pad,
        transcendentals=0,
        bytes_accessed=M * K * 4 + K * 4 + M * n_pad * 4 + n_pad * 4,
    )

    # TODO(synk): sweep pipeline_mode=pl.Buffered(3) on the x spec once the
    # per-generation VMEM budget leaves room; expected to be a few percent.
    return pl.pallas_call(
        kernel,
        out_shape=jax.ShapeDtypeStruct((M, n_pad), jnp.float32),
        grid_spec=pltpu.PrefetchScalarGridSpec(
            num_scalar_prefetch=0,
            grid=(gi, gk),
            in_specs=[
                pl.BlockSpec((tm, tk), lambda i, k: (i, k)),
                pl.BlockSpec((tk, 1), lambda i, k: (k, 0)),
                pl.BlockSpec((1, n_pad), lambda i, k: (0, 0)),
            ],
            out_specs=pl.BlockSpec((tm, n_pad), lambda i, k: (i, 0)),
        ),
        compiler_params=pltpu.CompilerParams(
            dimension_semantics=("parallel", "arbitrary"),
            vmem_limit_bytes=_VMEM_LIMIT_BYTES,
        ),
        cost_estimate=cost,
    )(x_flat, mapping_col, inv_count)


# ------------------------------- Module -----------------------------------

class MeanToERA5Pallas:
    """JAX/Pallas equivalent of MeanToERA5.forward for a fixed mapping.

    compute_dtype=jnp.bfloat16 (default): x tile and one-hot fed to the MXU
    in bf16, accumulation in f32 (fast path; ~bf16 input-rounding error).
    compute_dtype=jnp.float32: exact f32 MXU path.
    """

    # TODO(synk): the KMeans-based `set_mapping_by_coords` path is host-side
    # preprocessing (scikit-learn), not part of the forward; only the
    # precomputed mapping path is implemented here.
    def __init__(self, mapping, compute_dtype=jnp.bfloat16):
        mapping = np.asarray(mapping, dtype=np.int64).reshape(-1)
        hw = mapping.shape[0]
        # torch.unique returns sorted unique values; the reference stacks one
        # mean per *present* cluster in that order.
        uniq, inv_idx, counts = np.unique(
            mapping, return_inverse=True, return_counts=True
        )
        inv_idx = np.asarray(inv_idx, dtype=np.int32).reshape(-1)

        self.hw = int(hw)
        self.n_out = int(uniq.shape[0])
        self.n_pad = _round_up(self.n_out, _LANE)
        self.compute_dtype = compute_dtype

        # Pixel -> sorted-unique-cluster index, as a (K, 1) int32 column so the
        # kernel's lane-broadcast compare against iota is cheap.  Tiny in HBM.
        self.mapping_col = jnp.asarray(inv_idx.reshape(hw, 1))

        inv = np.zeros((1, self.n_pad), dtype=np.float32)
        inv[0, : self.n_out] = (1.0 / counts.astype(np.float64)).astype(np.float32)
        self.inv_count = jnp.asarray(inv)

    def _tiles(self, m):
        # Row tile: keep >= 2 blocks on multi-TC chips so both cores get work.
        if _NUM_CORES >= 2:
            tm = min(_TM_CAP, _round_up(_cdiv(m, 2), _SUBLANE))
        else:
            tm = min(_TM_CAP, _round_up(m, _SUBLANE))
        tm = max(int(tm), _SUBLANE)

        # K tile sized against the VMEM budget: double-buffered x (f32) and
        # mapping blocks, 2 output buffers, plus one-hot / bf16-x temporaries.
        cbytes = jnp.dtype(self.compute_dtype).itemsize
        fixed = 2 * tm * self.n_pad * 4 + 2 * self.n_pad * 4
        per_k = 2 * tm * 4 + 2 * 4 + self.n_pad * cbytes + tm * cbytes
        tk_budget = ((_TILE_BUDGET - fixed) // per_k) // _LANE * _LANE
        k128 = _round_up(self.hw, _LANE)
        tk = int(max(_LANE, min(_TK_CAP, max(_LANE, tk_budget), k128)))
        # TODO(synk): for very large cluster counts (huge n_pad) shrink tm
        # before tiling N; tiling N would re-stream the dominant x panel.
        return tm, tk

    def __call__(self, x):
        # x: (..., H, W)  ->  (..., n_out)
        lead = x.shape[:-2]
        hw = x.shape[-1] * x.shape[-2]
        assert hw == self.hw, (hw, self.hw)

        x_flat = jnp.reshape(x, (-1, hw))          # contiguous reshape, no copy
        m = x_flat.shape[0]
        tm, tk = self._tiles(m)

        out = _segment_mean(
            x_flat, self.mapping_col, self.inv_count,
            tm=tm, tk=tk, n_pad=self.n_pad, compute_dtype=self.compute_dtype,
        )
        out = out[:, : self.n_out]
        if out.dtype != x.dtype:
            out = out.astype(x.dtype)
        return jnp.reshape(out, lead + (self.n_out,))


# ----------------------------- Reference ----------------------------------

def _reference_forward(x_np, mapping_np):
    """NumPy re-implementation of the exact PyTorch forward semantics."""
    lead = x_np.shape[:-2]
    hw = x_np.shape[-1] * x_np.shape[-2]
    flat = x_np.reshape(lead + (hw,))
    order = np.argsort(mapping_np, kind="stable")
    gathered = flat[..., order]
    _, counts = np.unique(mapping_np, return_counts=True)
    outs, start = [], 0
    for cnt in counts:
        outs.append(gathered[..., start:start + cnt].mean(-1))
        start += cnt
    return np.stack(outs, axis=-1)


# -------------------------------- Main -------------------------------------

if __name__ == "__main__":
    key = jax.random.PRNGKey(0)

    B, C, H, W = 2, 4, 16, 16          # small NCHW input, HW = 256
    n_clusters = 64                     # number of ERA5 target points

    # Deterministic synthetic WRF->ERA5 mapping (every cluster appears).
    hw = H * W
    mapping = (np.arange(hw) * 7) % n_clusters

    x = jax.random.normal(key, (B, C, H, W), dtype=jnp.float32)
    y_ref = _reference_forward(np.asarray(x), mapping)

    # Exact f32 MXU path.
    model_f32 = MeanToERA5Pallas(mapping, compute_dtype=jnp.float32)
    y32 = jax.block_until_ready(model_f32(x))
    assert y32.shape == (B, C, n_clusters), y32.shape
    np.testing.assert_allclose(np.asarray(y32), y_ref, rtol=1e-5, atol=1e-5)

    # Default fast path: bf16 MXU feed, f32 accumulation.
    model_bf16 = MeanToERA5Pallas(mapping)
    y16 = jax.block_until_ready(model_bf16(x))
    assert y16.shape == (B, C, n_clusters), y16.shape
    np.testing.assert_allclose(np.asarray(y16), y_ref, rtol=2e-2, atol=2e-2)

    print("KERNEL_OK")
</pallas_src>

<mosaic_0001>
module attributes {stable_mosaic.version = 11 : i64} {
  func.func @kernel(%arg0: i32, %arg1: i32, %arg2: memref<8x256xf32, #tpu.memory_space<vmem>>, %arg3: memref<256x1xi32, #tpu.memory_space<vmem>>, %arg4: memref<1x128xf32, #tpu.memory_space<vmem>>, %arg5: memref<8x128xf32, #tpu.memory_space<vmem>>) attributes {dimension_semantics = [#tpu.dimension_semantics<parallel>, #tpu.dimension_semantics<arbitrary>], iteration_bounds = array<i64: 1, 1>, scalar_prefetch = 0 : i64, scratch_operands = 0 : i64, tpu.core_type = #tpu.core_type<tc>, window_params = [{transform_indices = @transform_0, window_bounds = array<i64: 8, 256>}, {transform_indices = @transform_1, window_bounds = array<i64: 256, 1>}, {pipeline_mode = #tpu.pipeline_mode<synchronous>, transform_indices = @transform_2, window_bounds = array<i64: 1, 128>}, {transform_indices = @transform_3, window_bounds = array<i64: 8, 128>}]} {
    %c0_i32 = arith.constant 0 : i32
    %0 = arith.cmpi eq, %arg1, %c0_i32 : i32
    %1 = arith.extui %0 : i1 to i32
    %c0_i32_0 = arith.constant 0 : i32
    %2 = arith.cmpi ne, %1, %c0_i32_0 : i32
    scf.if %2 {
      %cst_10 = arith.constant 0.000000e+00 : f32
      %17 = vector.broadcast %cst_10 : f32 to vector<8x128xf32>
      %c0_11 = arith.constant 0 : index
      %c0_12 = arith.constant 0 : index
      %18 = vector.load %arg5[%c0_11, %c0_12] : memref<8x128xf32, #tpu.memory_space<vmem>>, vector<8x128xf32>
      tpu.vector_store %arg5[%c0_11, %c0_12], %17 {strides = array<i32>} : memref<8x128xf32, #tpu.memory_space<vmem>>, vector<8x128xf32>,
    } else {
    }
    %c0 = arith.constant 0 : index
    %c0_1 = arith.constant 0 : index
    %3 = vector.load %arg2[%c0, %c0_1] : memref<8x256xf32, #tpu.memory_space<vmem>>, vector<8x256xf32>
    %c0_2 = arith.constant 0 : index
    %c0_3 = arith.constant 0 : index
    %4 = vector.load %arg3[%c0_2, %c0_3] : memref<256x1xi32, #tpu.memory_space<vmem>>, vector<256x1xi32>
    %5 = tpu.iota {dimensions = array<i32: 1>} : vector<256x128xi32>
    %6 = vector.broadcast %4 : vector<256x1xi32> to vector<256x128xi32>
    %7 = arith.cmpi eq, %6, %5 : vector<256x128xi32>
    %8 = arith.extui %7 : vector<256x128xi1> to vector<256x128xi32>
    %9 = arith.sitofp %8 : vector<256x128xi32> to vector<256x128xf32>
    %c0_4 = arith.constant 0 : index
    %c0_5 = arith.constant 0 : index
    %10 = vector.load %arg5[%c0_4, %c0_5] : memref<8x128xf32, #tpu.memory_space<vmem>>, vector<8x128xf32>
    %cst = arith.constant dense<0.000000e+00> : vector<8x128xf32>
    %11 = tpu.matmul %3, %9, %cst {dimension_numbers = #tpu.dot_dimension_numbers<[1], [0], [0], [1], [0, 0, 1, 1], [], []>} : vector<8x256xf32>, vector<256x128xf32>, vector<8x128xf32> -> vector<8x128xf32>
    %12 = arith.addf %10, %11 : vector<8x128xf32>
    %c0_6 = arith.constant 0 : index
    %c0_7 = arith.constant 0 : index
    %13 = vector.load %arg5[%c0_6, %c0_7] : memref<8x128xf32, #tpu.memory_space<vmem>>, vector<8x128xf32>
    tpu.vector_store %arg5[%c0_6, %c0_7], %12 {strides = array<i32>} : memref<8x128xf32, #tpu.memory_space<vmem>>, vector<8x128xf32>,
    %c0_i32_8 = arith.constant 0 : i32
    %14 = arith.cmpi eq, %arg1, %c0_i32_8 : i32
    %15 = arith.extui %14 : i1 to i32
    %c0_i32_9 = arith.constant 0 : i32
    %16 = arith.cmpi ne, %15, %c0_i32_9 : i32
    scf.if %16 {
      %c0_10 = arith.constant 0 : index
      %c0_11 = arith.constant 0 : index
      %17 = vector.load %arg5[%c0_10, %c0_11] : memref<8x128xf32, #tpu.memory_space<vmem>>, vector<8x128xf32>
      %c0_12 = arith.constant 0 : index
      %c0_13 = arith.constant 0 : index
      %18 = vector.load %arg4[%c0_12, %c0_13] : memref<1x128xf32, #tpu.memory_space<vmem>>, vector<1x128xf32>
      %19 = vector.broadcast %18 : vector<1x128xf32> to vector<8x128xf32>
      %20 = arith.mulf %17, %19 : vector<8x128xf32>
      %c0_14 = arith.constant 0 : index
      %c0_15 = arith.constant 0 : index
      %21 = vector.load %arg5[%c0_14, %c0_15] : memref<8x128xf32, #tpu.memory_space<vmem>>, vector<8x128xf32>
      tpu.vector_store %arg5[%c0_14, %c0_15], %20 {strides = array<i32>} : memref<8x128xf32, #tpu.memory_space<vmem>>, vector<8x128xf32>,
    } else {
    }
    return
  }
  func.func @transform_0(%arg0: i32, %arg1: i32) -> (i32, i32) {
    %c0_i32 = arith.constant 0 : i32
    return %arg0, %arg1 : i32, i32
  }
  func.func @transform_1(%arg0: i32, %arg1: i32) -> (i32, i32) {
    %c0_i32 = arith.constant 0 : i32
    %c0_i32_0 = arith.constant 0 : i32
    return %arg1, %c0_i32 : i32, i32
  }
  func.func @transform_2(%arg0: i32, %arg1: i32) -> (i32, i32) {
    %c0_i32 = arith.constant 0 : i32
    %c0_i32_0 = arith.constant 0 : i32
    %c0_i32_1 = arith.constant 0 : i32
    return %c0_i32, %c0_i32_0 : i32, i32
  }
  func.func @transform_3(%arg0: i32, %arg1: i32) -> (i32, i32) {
    %c0_i32 = arith.constant 0 : i32
    %c0_i32_0 = arith.constant 0 : i32
    return %arg0, %c0_i32 : i32, i32
  }
}

</mosaic_0001>

<llo_original>
// kernel: tpu_custom_call.1
$region0: #{tpu_custom_call.1}
  #allocation0 [shape = 'u32[]', space=smem, size = 0x4, offset = 0x4, fixed_abs, tag = 'smem constant byte address 0x4 - core index']
  #allocation1 [shape = 'u32[144,128]{1,0:T(1,128)}', space=vmem, size = 0x12000, scoped, tag = 'internal scratch']
  %s0 = inlined_call_operand.vmem [shape: f32[8,256], index: 0, kind: input, shape index: {}]
  %s1 = inlined_call_operand.vmem [shape: s32[256,1], index: 1, kind: input, shape index: {}]
  %s2 = inlined_call_operand.vmem [shape: f32[1,128], index: 2, kind: input, shape index: {}]
  %s3 = inlined_call_operand.hbm [shape: f32[8,128], index: 3, kind: output, shape index: {}]
  %s4 = sld [smem:[#allocation0]]
  $region30: #{tpu_custom_call.1} parent=0
    _
  %s6 = ssub.s32 1, %s4
  %s7 = scalar_select 0, %s6, %s4
  $region1: #{tpu_custom_call.1} parent=0
    #allocation2 [shape = 'u8[4096]{0}', space=vmem, size = 0x1000, scoped, tag = 'output window, operand 0, single buffered']
    #allocation3 [shape = 's32[1]{0}', space=sflag, size = 0x4, scoped, tag = 'scoped memory for tpu_custom_call.1']
    %8 = vsyncpa [#allocation3], 0
    // Predicated region
    $region2: #{tpu_custom_call.1} parent=1 // pred_check
      _
    $region3: #{tpu_custom_call.1} parent=1 // pred_check_branch
      %10 = sbr.rel (0) target = $region5
    $region4: #{tpu_custom_call.1} parent=1 // pred_region
      _
    $region5: #{tpu_custom_call.1} parent=1 // pred_fallthru
      _
    // Predicated region
    $region6: #{tpu_custom_call.1} parent=1 // pred_check
      _
    $region7: #{tpu_custom_call.1} parent=1 // pred_check_branch
      %12 = sbr.rel (0) target = $region9
    $region8: #{tpu_custom_call.1} parent=1 // pred_region
      _
    $region9: #{tpu_custom_call.1} parent=1 // pred_fallthru
      _
    // Predicated region
    $region10: #{tpu_custom_call.1} parent=1 // pred_check
      _
    $region11: #{tpu_custom_call.1} parent=1 // pred_check_branch
      %14 = sbr.rel (0) target = $region13
    $region12: #{tpu_custom_call.1} parent=1 // pred_region
      _
    $region13: #{tpu_custom_call.1} parent=1 // pred_fallthru
      _
    %p15 = scmp.eq.s32.totalorder 0, 0
    // Predicated region
    $region14: #{tpu_custom_call.1} parent=1 // pred_check
      %p16 = pneg %p15
    $region15: #{tpu_custom_call.1} parent=1 // pred_check_branch
      %18 = sbr.rel (%p16) target = $region17
    $region16: #{tpu_custom_call.1} parent=1 // pred_region
      %19 = vst [vmem:[#allocation2] sm:$0xff] 0.0
    $region17: #{tpu_custom_call.1} parent=1 // pred_fallthru
      _
    %v20 = vld [vmem:[%s0] sm:$0xff]
    %v21 = vld [vmem:[%s0 + $0x8] sm:$0xff]
    %v22 = vld [vmem:[%s1] sm:$0xff]
    %v23 = vld [vmem:[%s1 + $0x8] sm:$0xff]
    %v24 = vld [vmem:[%s1 + $0x10] sm:$0xff]
    %v25 = vld [vmem:[%s1 + $0x18] sm:$0xff]
    %v26 = vld [vmem:[%s1 + $0x20] sm:$0xff]
    %v27 = vld [vmem:[%s1 + $0x28] sm:$0xff]
    %v28 = vld [vmem:[%s1 + $0x30] sm:$0xff]
    %v29 = vld [vmem:[%s1 + $0x38] sm:$0xff]
    %v30 = vld [vmem:[%s1 + $0x40] sm:$0xff]
    %v31 = vld [vmem:[%s1 + $0x48] sm:$0xff]
    %v32 = vld [vmem:[%s1 + $0x50] sm:$0xff]
    %v33 = vld [vmem:[%s1 + $0x58] sm:$0xff]
    %v34 = vld [vmem:[%s1 + $0x60] sm:$0xff]
    %v35 = vld [vmem:[%s1 + $0x68] sm:$0xff]
    %v36 = vld [vmem:[%s1 + $0x70] sm:$0xff]
    %v37 = vld [vmem:[%s1 + $0x78] sm:$0xff]
    %v38 = vld [vmem:[%s1 + $0x80] sm:$0xff]
    %v39 = vld [vmem:[%s1 + $0x88] sm:$0xff]
    %v40 = vld [vmem:[%s1 + $0x90] sm:$0xff]
    %v41 = vld [vmem:[%s1 + $0x98] sm:$0xff]
    %v42 = vld [vmem:[%s1 + $0xa0] sm:$0xff]
    %v43 = vld [vmem:[%s1 + $0xa8] sm:$0xff]
    %v44 = vld [vmem:[%s1 + $0xb0] sm:$0xff]
    %v45 = vld [vmem:[%s1 + $0xb8] sm:$0xff]
    %v46 = vld [vmem:[%s1 + $0xc0] sm:$0xff]
    %v47 = vld [vmem:[%s1 + $0xc8] sm:$0xff]
    %v48 = vld [vmem:[%s1 + $0xd0] sm:$0xff]
    %v49 = vld [vmem:[%s1 + $0xd8] sm:$0xff]
    %v50 = vld [vmem:[%s1 + $0xe0] sm:$0xff]
    %v51 = vld [vmem:[%s1 + $0xe8] sm:$0xff]
    %v52 = vld [vmem:[%s1 + $0xf0] sm:$0xff]
    %v53 = vld [vmem:[%s1 + $0xf8] sm:$0xff]
    %v54 = vlaneseq
    %v55 = vand.u32 %v54, 127
    %56 = vset.pattern.permute.xlu0 0
    %57 = vperm.xlu0 %56, %v22
    %v58 = vpop.permute.xlu0 %57
    %59 = vset.pattern.permute.xlu0 0
    %60 = vperm.xlu0 %59, %v23
    %v61 = vpop.permute.xlu0 %60
    %62 = vset.pattern.permute.xlu0 0
    %63 = vperm.xlu0 %62, %v24
    %v64 = vpop.permute.xlu0 %63
    %65 = vset.pattern.permute.xlu0 0
    %66 = vperm.xlu0 %65, %v25
    %v67 = vpop.permute.xlu0 %66
    %68 = vset.pattern.permute.xlu0 0
    %69 = vperm.xlu0 %68, %v26
    %v70 = vpop.permute.xlu0 %69
    %71 = vset.pattern.permute.xlu0 0
    %72 = vperm.xlu0 %71, %v27
    %v73 = vpop.permute.xlu0 %72
    %74 = vset.pattern.permute.xlu0 0
    %75 = vperm.xlu0 %74, %v28
    %v76 = vpop.permute.xlu0 %75
    %77 = vset.pattern.permute.xlu0 0
    %78 = vperm.xlu0 %77, %v29
    %v79 = vpop.permute.xlu0 %78
    %80 = vset.pattern.permute.xlu0 0
    %81 = vperm.xlu0 %80, %v30
    %v82 = vpop.permute.xlu0 %81
    %83 = vset.pattern.permute.xlu0 0
    %84 = vperm.xlu0 %83, %v31
    %v85 = vpop.permute.xlu0 %84
    %86 = vset.pattern.permute.xlu0 0
    %87 = vperm.xlu0 %86, %v32
    %v88 = vpop.permute.xlu0 %87
    %89 = vset.pattern.permute.xlu0 0
    %90 = vperm.xlu0 %89, %v33
    %v91 = vpop.permute.xlu0 %90
    %92 = vset.pattern.permute.xlu0 0
    %93 = vperm.xlu0 %92, %v34
    %v94 = vpop.permute.xlu0 %93
    %95 = vset.pattern.permute.xlu0 0
    %96 = vperm.xlu0 %95, %v35
    %v97 = vpop.permute.xlu0 %96
    %98 = vset.pattern.permute.xlu0 0
    %99 = vperm.xlu0 %98, %v36
    %v100 = vpop.permute.xlu0 %99
    %101 = vset.pattern.permute.xlu0 0
    %102 = vperm.xlu0 %101, %v37
    %v103 = vpop.permute.xlu0 %102
    %104 = vset.pattern.permute.xlu0 0
    %105 = vperm.xlu0 %104, %v38
    %v106 = vpop.permute.xlu0 %105
    %107 = vset.pattern.permute.xlu0 0
    %108 = vperm.xlu0 %107, %v39
    %v109 = vpop.permute.xlu0 %108
    %110 = vset.pattern.permute.xlu0 0
    %111 = vperm.xlu0 %110, %v40
    %v112 = vpop.permute.xlu0 %111
    %113 = vset.pattern.permute.xlu0 0
    %114 = vperm.xlu0 %113, %v41
    %v115 = vpop.permute.xlu0 %114
    %116 = vset.pattern.permute.xlu0 0
    %117 = vperm.xlu0 %116, %v42
    %v118 = vpop.permute.xlu0 %117
    %119 = vset.pattern.permute.xlu0 0
    %120 = vperm.xlu0 %119, %v43
    %v121 = vpop.permute.xlu0 %120
    %122 = vset.pattern.permute.xlu0 0
    %123 = vperm.xlu0 %122, %v44
    %v124 = vpop.permute.xlu0 %123
    %125 = vset.pattern.permute.xlu0 0
    %126 = vperm.xlu0 %125, %v45
    %v127 = vpop.permute.xlu0 %126
    %128 = vset.pattern.permute.xlu0 0
    %129 = vperm.xlu0 %128, %v46
    %v130 = vpop.permute.xlu0 %129
    %131 = vset.pattern.permute.xlu0 0
    %132 = vperm.xlu0 %131, %v47
    %v133 = vpop.permute.xlu0 %132
    %134 = vset.pattern.permute.xlu0 0
    %135 = vperm.xlu0 %134, %v48
    %v136 = vpop.permute.xlu0 %135
    %137 = vset.pattern.permute.xlu0 0
    %138 = vperm.xlu0 %137, %v49
    %v139 = vpop.permute.xlu0 %138
    %140 = vset.pattern.permute.xlu0 0
    %141 = vperm.xlu0 %140, %v50
    %v142 = vpop.permute.xlu0 %141
    %143 = vset.pattern.permute.xlu0 0
    %144 = vperm.xlu0 %143, %v51
    %v145 = vpop.permute.xlu0 %144
    %146 = vset.pattern.permute.xlu0 0
    %147 = vperm.xlu0 %146, %v52
    %v148 = vpop.permute.xlu0 %147
    %149 = vset.pattern.permute.xlu0 0
    %150 = vperm.xlu0 %149, %v53
    %v151 = vpop.permute.xlu0 %150
    %vm152 = vcmp.eq.s32.totalorder %v58, %v55
    %vm153 = vcmp.eq.s32.totalorder %v61, %v55
    %vm154 = vcmp.eq.s32.totalorder %v64, %v55
    %vm155 = vcmp.eq.s32.totalorder %v67, %v55
    %vm156 = vcmp.eq.s32.totalorder %v70, %v55
    %vm157 = vcmp.eq.s32.totalorder %v73, %v55
    %vm158 = vcmp.eq.s32.totalorder %v76, %v55
    %vm159 = vcmp.eq.s32.totalorder %v79, %v55
    %vm160 = vcmp.eq.s32.totalorder %v82, %v55
    %vm161 = vcmp.eq.s32.totalorder %v85, %v55
    %vm162 = vcmp.eq.s32.totalorder %v88, %v55
    %vm163 = vcmp.eq.s32.totalorder %v91, %v55
    %vm164 = vcmp.eq.s32.totalorder %v94, %v55
    %vm165 = vcmp.eq.s32.totalorder %v97, %v55
    %vm166 = vcmp.eq.s32.totalorder %v100, %v55
    %vm167 = vcmp.eq.s32.totalorder %v103, %v55
    %vm168 = vcmp.eq.s32.totalorder %v106, %v55
    %vm169 = vcmp.eq.s32.totalorder %v109, %v55
    %vm170 = vcmp.eq.s32.totalorder %v112, %v55
    %vm171 = vcmp.eq.s32.totalorder %v115, %v55
    %vm172 = vcmp.eq.s32.totalorder %v118, %v55
    %vm173 = vcmp.eq.s32.totalorder %v121, %v55
    %vm174 = vcmp.eq.s32.totalorder %v124, %v55
    %vm175 = vcmp.eq.s32.totalorder %v127, %v55
    %vm176 = vcmp.eq.s32.totalorder %v130, %v55
    %vm177 = vcmp.eq.s32.totalorder %v133, %v55
    %vm178 = vcmp.eq.s32.totalorder %v136, %v55
    %vm179 = vcmp.eq.s32.totalorder %v139, %v55
    %vm180 = vcmp.eq.s32.totalorder %v142, %v55
    %vm181 = vcmp.eq.s32.totalorder %v145, %v55
    %vm182 = vcmp.eq.s32.totalorder %v148, %v55
    %vm183 = vcmp.eq.s32.totalorder %v151, %v55
    %v184 = vsel %vm152, 1, 0
    %v185 = vsel %vm153, 1, 0
    %v186 = vsel %vm154, 1, 0
    %v187 = vsel %vm155, 1, 0
    %v188 = vsel %vm156, 1, 0
    %v189 = vsel %vm157, 1, 0
    %v190 = vsel %vm158, 1, 0
    %v191 = vsel %vm159, 1, 0
    %v192 = vsel %vm160, 1, 0
    %v193 = vsel %vm161, 1, 0
    %v194 = vsel %vm162, 1, 0
    %v195 = vsel %vm163, 1, 0
    %v196 = vsel %vm164, 1, 0
    %v197 = vsel %vm165, 1, 0
    %v198 = vsel %vm166, 1, 0
    %v199 = vsel %vm167, 1, 0
    %v200 = vsel %vm168, 1, 0
    %v201 = vsel %vm169, 1, 0
    %v202 = vsel %vm170, 1, 0
    %v203 = vsel %vm171, 1, 0
    %v204 = vsel %vm172, 1, 0
    %v205 = vsel %vm173, 1, 0
    %v206 = vsel %vm174, 1, 0
    %v207 = vsel %vm175, 1, 0
    %v208 = vsel %vm176, 1, 0
    %v209 = vsel %vm177, 1, 0
    %v210 = vsel %vm178, 1, 0
    %v211 = vsel %vm179, 1, 0
    %v212 = vsel %vm180, 1, 0
    %v213 = vsel %vm181, 1, 0
    %v214 = vsel %vm182, 1, 0
    %v215 = vsel %vm183, 1, 0
    %v216 = vcvt.s32.f32 %v184
    %v217 = vcvt.s32.f32 %v185
    %v218 = vcvt.s32.f32 %v186
    %v219 = vcvt.s32.f32 %v187
    %v220 = vcvt.s32.f32 %v188
    %v221 = vcvt.s32.f32 %v189
    %v222 = vcvt.s32.f32 %v190
    %v223 = vcvt.s32.f32 %v191
    %v224 = vcvt.s32.f32 %v192
    %v225 = vcvt.s32.f32 %v193
    %v226 = vcvt.s32.f32 %v194
    %v227 = vcvt.s32.f32 %v195
    %v228 = vcvt.s32.f32 %v196
    %v229 = vcvt.s32.f32 %v197
    %v230 = vcvt.s32.f32 %v198
    %v231 = vcvt.s32.f32 %v199
    %v232 = vcvt.s32.f32 %v200
    %v233 = vcvt.s32.f32 %v201
    %v234 = vcvt.s32.f32 %v202
    %v235 = vcvt.s32.f32 %v203
    %v236 = vcvt.s32.f32 %v204
    %v237 = vcvt.s32.f32 %v205
    %v238 = vcvt.s32.f32 %v206
    %v239 = vcvt.s32.f32 %v207
    %v240 = vcvt.s32.f32 %v208
    %v241 = vcvt.s32.f32 %v209
    %v242 = vcvt.s32.f32 %v210
    %v243 = vcvt.s32.f32 %v211
    %v244 = vcvt.s32.f32 %v212
    %v245 = vcvt.s32.f32 %v213
    %v246 = vcvt.s32.f32 %v214
    %v247 = vcvt.s32.f32 %v215
    %v248 = vld [vmem:[#allocation2] sm:$0xff]
    %249 = vmatprep.subr.mxu0 0.0
    %250 = vmatpush1.msra.mxu0 %v216
    %251 = vmatprep.subr.mxu0 0.0
    %252 = vmatpush1.msra.mxu0 %v217
    %253 = vmatprep.subr.mxu0 0.0
    %254 = vmatpush1.msra.mxu0 %v218
    %255 = vmatprep.subr.mxu0 0.0
    %256 = vmatpush1.msra.mxu0 %v219
    %257 = vmatprep.subr.mxu0 0.0
    %258 = vmatpush1.msra.mxu0 %v220
    %259 = vmatprep.subr.mxu0 0.0
    %260 = vmatpush1.msra.mxu0 %v221
    %261 = vmatprep.subr.mxu0 0.0
    %262 = vmatpush1.msra.mxu0 %v222
    %263 = vmatprep.subr.mxu0 0.0
    %264 = vmatpush1.msra.mxu0 %v223
    %265 = vmatprep.subr.mxu0 0.0
    %266 = vmatpush1.msra.mxu0 %v224
    %267 = vmatprep.subr.mxu0 0.0
    %268 = vmatpush1.msra.mxu0 %v225
    %269 = vmatprep.subr.mxu0 0.0
    %270 = vmatpush1.msra.mxu0 %v226
    %271 = vmatprep.subr.mxu0 0.0
    %272 = vmatpush1.msra.mxu0 %v227
    %273 = vmatprep.subr.mxu0 0.0
    %274 = vmatpush1.msra.mxu0 %v228
    %275 = vmatprep.subr.mxu0 0.0
    %276 = vmatpush1.msra.mxu0 %v229
    %277 = vmatprep.subr.mxu0 0.0
    %278 = vmatpush1.msra.mxu0 %v230
    %279 = vmatprep.subr.mxu0 0.0
    %280 = vmatpush1.msra.mxu0 %v231
    %281 = vmatprep.subr.mxu0 0.0
    %282 = vmatpush1.msra.mxu0 %v232
    %283 = vmatprep.subr.mxu0 0.0
    %284 = vmatpush1.msra.mxu0 %v233
    %285 = vmatprep.subr.mxu0 0.0
    %286 = vmatpush1.msra.mxu0 %v234
    %287 = vmatprep.subr.mxu0 0.0
    %288 = vmatpush1.msra.mxu0 %v235
    %289 = vmatprep.subr.mxu0 0.0
    %290 = vmatpush1.msra.mxu0 %v236
    %291 = vmatprep.subr.mxu0 0.0
    %292 = vmatpush1.msra.mxu0 %v237
    %293 = vmatprep.subr.mxu0 0.0
    %294 = vmatpush1.msra.mxu0 %v238
    %295 = vmatprep.subr.mxu0 0.0
    %296 = vmatpush1.msra.mxu0 %v239
    %297 = vmatprep.subr.mxu0 0.0
    %298 = vmatpush1.msra.mxu0 %v240
    %299 = vmatprep.subr.mxu0 0.0
    %300 = vmatpush1.msra.mxu0 %v241
    %301 = vmatprep.subr.mxu0 0.0
    %302 = vmatpush1.msra.mxu0 %v242
    %303 = vmatprep.subr.mxu0 0.0
    %304 = vmatpush1.msra.mxu0 %v243
    %305 = vmatprep.subr.mxu0 0.0
    %306 = vmatpush1.msra.mxu0 %v244
    %307 = vmatprep.subr.mxu0 0.0
    %308 = vmatpush1.msra.mxu0 %v245
    %309 = vmatprep.subr.mxu0 0.0
    %310 = vmatpush1.msra.mxu0 %v246
    %311 = vmatprep.subr.mxu0 0.0
    %312 = vmatpush1.msra.mxu0 %v247
    %313 = vmatprep.mubr.f32.mxu0 %v21
    %314 = vmatmul.mubr.f32.gmra.mrb[0].mxu0 %v20
    %v315 = vpop.f32.mrb[0].mxu0
    %v316 = vadd.f32 0.0, %v315
    %v317 = vpop.f32.mrb[0].mxu0
    %318 = vdwg.mxu0
    %v319 = vadd.f32 %v248, %v316
    %320 = vst [vmem:[#allocation2] sm:$0xff] %v319
    // Predicated region
    $region18: #{tpu_custom_call.1} parent=1 // pred_check
      %p321 = pneg %p15
    $region19: #{tpu_custom_call.1} parent=1 // pred_check_branch
      %323 = sbr.rel (%p321) target = $region21
    $region20: #{tpu_custom_call.1} parent=1 // pred_region
      %v324 = vld [vmem:[#allocation2] sm:$0xff]
      %v325 = vld [vmem:[%s2] sm:$0x1]
      %v327 = vlaneseq
      %v328 = vshrl.u32 %v327, 7
      %v329 = vsub.s32 0, %v328
      %v330 = vrot.slane %v325, %v329
      %v332 = vmul.f32 %v324, %v330
      %333 = vst [vmem:[#allocation2] sm:$0xff] %v332
    $region21: #{tpu_custom_call.1} parent=1 // pred_fallthru
      _
    // Predicated region
    $region22: #{tpu_custom_call.1} parent=1 // pred_check
      _
    $region23: #{tpu_custom_call.1} parent=1 // pred_check_branch
      %335 = sbr.rel (0) target = $region25
    $region24: #{tpu_custom_call.1} parent=1 // pred_region
      %s337 = ssub.s32 128, 128
      %338 = vsyncadd [#allocation3], %s337
      %s340 = sshll.u32 [#allocation2], 4
      %s341 = int_to_ptr.vmem [resolvable:$true] %s340
      %343 = dma.vmem_to_hbm [thread:$0]  %s341, 128, %s3, [#allocation3]
    $region25: #{tpu_custom_call.1} parent=1 // pred_fallthru
      _
    // Predicated region
    $region26: #{tpu_custom_call.1} parent=1 // pred_check
      _
    $region27: #{tpu_custom_call.1} parent=1 // pred_check_branch
      %345 = sbr.rel (0) target = $region29
    $region28: #{tpu_custom_call.1} parent=1 // pred_region
      %346 = dma.done [#allocation3], 128
    $region29: #{tpu_custom_call.1} parent=1 // pred_fallthru
      _
    %347 = vsyncpa [#allocation3], 1

</llo_original>
